<compile_context>
chip_gen: v6e
topology: v6e:2x2x1
jax: 0.10.0
libtpu: 0.0.40
codegen_flags: <defaults>
</compile_context>

<pallas_src>
import math

import jax
import jax.numpy as jnp
import numpy as np
from jax.experimental import pallas as pl
from jax.experimental.pallas import tpu as pltpu


def _device_kind():
    try:
        return jax.devices()[0].device_kind.lower()
    except Exception:
        return ""


# ----------------------------------------------------------------------------
# Pallas kernel: TriModalCrossAttention_ver2 forward (input_dim == 1, eval)
# ----------------------------------------------------------------------------
# Flat weight packing (25 f32 scalars, SMEM):
#   [0:3]  W_q coeffs (x1, x2, x3),   [3] b_q
#   [4+4m : 8+4m]   = (w_k, b_k, w_v, b_v) for modality m in {0,1,2}
#   [16+3m : 19+3m] = (w_o_x, w_o_ctx, b_o) for modality m
def _make_fusion_kernel(batch, bt, seq, nsteps, exp_dtype, ck=32):
    n_chunks = seq // ck
    guard = (nsteps > 1) and (nsteps * bt != batch)

    def kernel(w_ref, x1_ref, x2_ref, x3_ref,
               o1_ref, o2_ref, o3_ref,
               xt1_ref, xt2_ref, xt3_ref):
        # ---- hoist the 25 scalar weights out of every loop (SMEM reads) ----
        wq = [w_ref[i] for i in range(3)]
        bq = w_ref[3]
        wk = [w_ref[4 + 4 * m] for m in range(3)]
        bk = [w_ref[5 + 4 * m] for m in range(3)]
        wv = [w_ref[6 + 4 * m] for m in range(3)]
        bv = [w_ref[7 + 4 * m] for m in range(3)]
        wox = [w_ref[16 + 3 * m] for m in range(3)]
        woc = [w_ref[17 + 3 * m] for m in range(3)]
        bo = [w_ref[18 + 3 * m] for m in range(3)]

        # ---- column-layout copies via in-kernel transposes (idle XLU) ----
        xt1_ref[...] = jnp.transpose(x1_ref[...])        # (seq, bt)
        xt2_ref[...] = jnp.transpose(x2_ref[...])
        xt3_ref[...] = jnp.transpose(x3_ref[...])

        # ---- block-wide prologue: queries + analytic rank-1 softmax max ----
        x1b, x2b, x3b = x1_ref[...], x2_ref[...], x3_ref[...]      # (bt, seq)
        # attention scale 1/sqrt(input_dim) == 1.0 because input_dim == 1
        q_blk = wq[0] * x1b + wq[1] * x2b + wq[2] * x3b + bq        # (bt, seq)
        q_neg = q_blk < 0.0
        x_blks = (x1b, x2b, x3b)
        mx_blk = []
        for m in range(3):
            k_b = wk[m] * x_blks[m] + bk[m]                         # (bt, seq)
            kmax = jnp.max(k_b, axis=1, keepdims=True)              # (bt, 1)
            kmin = jnp.min(k_b, axis=1, keepdims=True)
            # exact: max_j q_i*k_j = q_i*kmax if q_i >= 0 else q_i*kmin
            mx_blk.append(jnp.where(q_neg, q_blk * kmin, q_blk * kmax))

        x_refs = (x1_ref, x2_ref, x3_ref)
        xt_refs = (xt1_ref, xt2_ref, xt3_ref)
        o_refs = (o1_ref, o2_ref, o3_ref)

        # ---- statically unrolled rows x modalities x key chunks ----
        for b in range(bt):
            if nsteps == 1 and b >= batch:
                continue                       # pure-pad row, dropped at trace

            def row_work(b=b):
                q = q_blk[b:b + 1, :]                              # (1, seq)
                for m in range(3):
                    xr = x_refs[m][pl.ds(b, 1), :]                 # (1, seq)
                    mx = mx_blk[m][b:b + 1, :]                     # (1, seq)
                    denom = jnp.zeros((1, seq), jnp.float32)
                    ctx = jnp.zeros((1, seq), jnp.float32)
                    # chunked keys: never materialize a (seq, seq) score tile
                    for c in range(n_chunks):
                        xc = xt_refs[m][pl.ds(c * ck, ck), pl.ds(b, 1)]  # (ck,1)
                        kc = wk[m] * xc + bk[m]
                        vc = wv[m] * xc + bv[m]
                        arg = kc * q - mx                          # (ck, seq) <= 0
                        p = jnp.exp(arg.astype(exp_dtype)).astype(jnp.float32)
                        denom = denom + jnp.sum(p, axis=0, keepdims=True)
                        ctx = ctx + jnp.sum(p * vc, axis=0, keepdims=True)
                    # dropout(attention_weights) is identity in eval mode
                    ctx = ctx * pl.reciprocal(denom, approx=False)
                    out = wox[m] * xr + woc[m] * ctx + bo[m]
                    o_refs[m][pl.ds(b, 1), :] = out.astype(o_refs[m].dtype)

            if guard:
                row_idx = pl.program_id(0) * bt + b
                pl.when(row_idx < batch)(row_work)
            else:
                row_work()

    return kernel


def tri_modal_cross_attention(x1, x2, x3, fp):
    """x{1,2,3}: (B, 1, 256) float32 modality features (pre-permute layout).

    Returns (out1, out2, out3, global_feature) with out_i: (B, 1, 256) and
    global_feature: (B, 1, 768), i.e. already permuted back the way the model
    does right after the fusion block.
    """
    B, one, S = x1.shape
    assert one == 1

    kind = _device_kind()
    two_tc = any(t in kind for t in ("v7", "7x", "v4", "v5p"))
    use_bf16_exp = ("v6" in kind) or ("v7" in kind) or ("7x" in kind)
    exp_dtype = jnp.bfloat16 if use_bf16_exp else jnp.float32

    # Block rows: multiple of 8 (sublane-tile / transpose alignment). One grid
    # step on single-TC parts; >= 2 steps on megacore parts when B allows.
    if two_tc and B > 8:
        bt = 8
    else:
        bt = 8 if B <= 8 else 16
    b_pad = pl.cdiv(B, bt) * bt
    nsteps = b_pad // bt

    f1, f2, f3 = (x.reshape(B, S) for x in (x1, x2, x3))
    if b_pad != B:
        pad = ((0, b_pad - B), (0, 0))
        f1, f2, f3 = jnp.pad(f1, pad), jnp.pad(f2, pad), jnp.pad(f3, pad)

    row_spec = pl.BlockSpec((bt, S), lambda i: (i, 0))
    w_spec = pl.BlockSpec(memory_space=pltpu.MemorySpace.SMEM)
    out_sd = jax.ShapeDtypeStruct((b_pad, S), jnp.float32)

    kernel = _make_fusion_kernel(B, bt, S, nsteps, exp_dtype)
    o1, o2, o3 = pl.pallas_call(
        kernel,
        out_shape=(out_sd, out_sd, out_sd),
        grid=(nsteps,),
        in_specs=[w_spec, row_spec, row_spec, row_spec],
        out_specs=(row_spec, row_spec, row_spec),
        scratch_shapes=[pltpu.VMEM((S, bt), jnp.float32),
                        pltpu.VMEM((S, bt), jnp.float32),
                        pltpu.VMEM((S, bt), jnp.float32)],
        compiler_params=pltpu.CompilerParams(
            dimension_semantics=("parallel",)),
    )(fp["flat"], f1, f2, f3)

    o1 = o1[:B][:, None, :]
    o2 = o2[:B][:, None, :]
    o3 = o3[:B][:, None, :]
    # TODO(synk): `shuffle_interleave` is not defined in the provided source;
    # assumed semantics = interleave output1/output2 along the seq axis.
    vision = jnp.stack([o1, o2], axis=-1).reshape(B, 1, 2 * S)
    global_feature = jnp.concatenate([vision, o3], axis=-1)       # (B, 1, 3S)
    return o1, o2, o3, global_feature


# ----------------------------------------------------------------------------
# Pallas kernel: fc_vis (Linear 400 -> 256), shared by MRI and PET features
# ----------------------------------------------------------------------------
def _linear_kernel(x_ref, w_ref, b_ref, o_ref):
    y = jnp.dot(x_ref[...], w_ref[...], preferred_element_type=jnp.float32)
    o_ref[...] = (y + b_ref[...]).astype(o_ref.dtype)


def pallas_linear(x, w, b):
    """x: (M, Din), w: (Dout, Din) (PyTorch layout), b: (1, Dout) -> (M, Dout)."""
    M, Din = x.shape
    Dout = w.shape[0]
    # Pre-transpose to (Din, Dout) host-side (no in-kernel relayout) and make
    # the K lane padding (400 -> 512) explicit so it folds into the operands.
    kp = pl.cdiv(Din, 128) * 128
    w_t = jnp.transpose(w)
    if kp != Din:
        x = jnp.pad(x, ((0, 0), (0, kp - Din)))
        w_t = jnp.pad(w_t, ((0, kp - Din), (0, 0)))
    return pl.pallas_call(
        _linear_kernel,
        out_shape=jax.ShapeDtypeStruct((M, Dout), jnp.float32),
        grid=(1,),
        in_specs=[
            pl.BlockSpec((M, kp), lambda i: (0, 0)),
            pl.BlockSpec((kp, Dout), lambda i: (0, 0)),
            pl.BlockSpec((1, Dout), lambda i: (0, 0)),
        ],
        out_specs=pl.BlockSpec((M, Dout), lambda i: (0, 0)),
    )(x, w_t, b)


# ----------------------------------------------------------------------------
# Parameter init (deterministic, PyTorch-nn.Linear-style uniform bounds)
# ----------------------------------------------------------------------------
def _init_linear(key, out_d, in_d):
    bound = 1.0 / math.sqrt(in_d)
    kw, kb = jax.random.split(key)
    w = jax.random.uniform(kw, (out_d, in_d), jnp.float32, -bound, bound)
    b = jax.random.uniform(kb, (out_d,), jnp.float32, -bound, bound)
    return w, b


def init_params(key, mri_flat_dim, cli_dim):
    D = 1  # the model instantiates TriModalCrossAttention_ver2(input_dim=1)
    assert D == 1  # the kernel folds the 1/sqrt(input_dim) scale as 1.0
    keys = jax.random.split(key, 16)
    fc_w, fc_b = _init_linear(keys[0], 256, 400)
    wq, bq = _init_linear(keys[1], D, 3 * D)
    wk, bk, wv, bv = [], [], [], []
    for i in range(3):
        w1, b1 = _init_linear(keys[2 + 2 * i], D, D)
        w2, b2 = _init_linear(keys[3 + 2 * i], D, D)
        wk.append(w1); bk.append(b1); wv.append(w2); bv.append(b2)
    wo, bo = [], []
    for i in range(3):
        w1, b1 = _init_linear(keys[8 + i], D, 2 * D)
        wo.append(w1); bo.append(b1)

    # pack the 25 scalars the fusion kernel reads from SMEM
    pieces = [wq.reshape(-1), bq.reshape(-1)]
    for m in range(3):
        pieces += [wk[m].reshape(-1), bk[m].reshape(-1),
                   wv[m].reshape(-1), bv[m].reshape(-1)]
    for m in range(3):
        pieces += [wo[m].reshape(-1), bo[m].reshape(-1)]
    flat = jnp.concatenate(pieces).astype(jnp.float32)            # (25,)

    fusion = dict(
        wq=wq, bq=bq,
        wk=jnp.stack(wk), bk=jnp.stack(bk),
        wv=jnp.stack(wv), bv=jnp.stack(bv),
        wo=jnp.stack(wo), bo=jnp.stack(bo),
        flat=flat,
    )
    # deterministic stand-in projections for the undefined encoders
    resnet_proj = jax.random.normal(keys[11], (mri_flat_dim, 400), jnp.float32) * 0.02
    table_proj = jax.random.normal(keys[12], (cli_dim, 256), jnp.float32) * 0.02
    return dict(fc_vis_w=fc_w, fc_vis_b=fc_b[None, :], fusion=fusion,
                resnet_proj=resnet_proj, table_proj=table_proj)


# ----------------------------------------------------------------------------
# Top-level forward mirroring Triple_model_CrossAttentionFusion_self_KAN
# ----------------------------------------------------------------------------
def triple_model_forward(params, mri, pet, cli):
    B = mri.shape[0]
    # TODO(synk): get_pretrained_Vision_Encoder (3D ResNet -> 400-d) is not in
    # the provided source; deterministic flatten+projection stand-in.
    mri_res = mri.reshape(B, -1) @ params["resnet_proj"]           # (B, 400)
    pet_res = pet.reshape(B, -1) @ params["resnet_proj"]           # (B, 400)
    # TODO(synk): TransformerEncoder(output_dim=256) is not in the provided
    # source; deterministic projection stand-in.
    cli_feature = cli @ params["table_proj"]                       # (B, 256)

    # single fc_vis kernel call for both modalities (weight DMA'd once)
    vis = pallas_linear(jnp.concatenate([mri_res, pet_res], axis=0),
                        params["fc_vis_w"], params["fc_vis_b"])    # (2B, 256)
    mri_feature = vis[:B][:, None, :]                              # (B, 1, 256)
    pet_feature = vis[B:][:, None, :]
    cli_feature = cli_feature[:, None, :]

    # TODO(synk): SelfAttention(16, 256, 256) is not in the provided source;
    # identity stand-in.

    # The fusion kernel consumes the (B, 1, 256) features directly; the
    # permute(0,2,1) before the fusion and the permute back afterwards are
    # folded into the kernel's lane-dense layout.
    o1, o2, o3, global_feature = tri_modal_cross_attention(
        mri_feature, pet_feature, cli_feature, params["fusion"])

    # TODO(synk): DenseNet classify head is not in the provided source; the
    # fused global feature is returned in its place.
    return mri_feature, pet_feature, cli_feature, global_feature


# ----------------------------------------------------------------------------
# Pure-JAX reference of the fusion (literal module ops, for verification)
# ----------------------------------------------------------------------------
def fusion_reference(x1, x2, x3, fp):
    """Takes (B, 1, 256) features, mirrors the model's permute -> fusion ->
    permute-back, using the literal concat/matmul/softmax ops."""
    hp = jax.lax.Precision.HIGHEST

    def lin(x, w, b):
        return jnp.einsum("bsd,od->bso", x, w, precision=hp) + b.reshape(1, 1, -1)

    x1, x2, x3 = (jnp.transpose(x, (0, 2, 1)) for x in (x1, x2, x3))  # (B, S, 1)
    D = x1.shape[-1]
    q = lin(jnp.concatenate([x1, x2, x3], -1), fp["wq"], fp["bq"])

    def attend(x, wk, bk, wv, bv):
        k = lin(x, wk, bk)
        v = lin(x, wv, bv)
        s = jnp.einsum("bqd,bkd->bqk", q, k, precision=hp) / math.sqrt(D)
        a = jax.nn.softmax(s, axis=-1)
        return jnp.einsum("bqk,bkd->bqd", a, v, precision=hp)

    outs = []
    for idx, x in enumerate((x1, x2, x3)):
        ctx = attend(x, fp["wk"][idx], fp["bk"][idx], fp["wv"][idx], fp["bv"][idx])
        outs.append(lin(jnp.concatenate([x, ctx], -1), fp["wo"][idx], fp["bo"][idx]))
    return tuple(jnp.transpose(o, (0, 2, 1)) for o in outs)       # (B, 1, 256)


# ----------------------------------------------------------------------------
if __name__ == "__main__":
    key = jax.random.PRNGKey(0)
    k_mri, k_pet, k_cli, k_par = jax.random.split(key, 4)

    B = 2
    mri = jax.random.normal(k_mri, (B, 1, 8, 8, 8), jnp.float32)   # small 3D volume
    pet = jax.random.normal(k_pet, (B, 1, 8, 8, 8), jnp.float32)
    cli = jax.random.normal(k_cli, (B, 9), jnp.float32)            # tabular clinical

    params = init_params(k_par, mri_flat_dim=1 * 8 * 8 * 8, cli_dim=9)

    mri_f, pet_f, cli_f, out = triple_model_forward(params, mri, pet, cli)
    jax.block_until_ready((mri_f, pet_f, cli_f, out))

    # verify the Pallas fusion kernel against the literal pure-JAX reference
    o1, o2, o3, _ = tri_modal_cross_attention(mri_f, pet_f, cli_f, params["fusion"])
    jax.block_until_ready((o1, o2, o3))
    r1, r2, r3 = fusion_reference(mri_f, pet_f, cli_f, params["fusion"])
    for got, ref in ((o1, r1), (o2, r2), (o3, r3)):
        np.testing.assert_allclose(np.asarray(got), np.asarray(ref),
                                   rtol=1e-2, atol=1e-2)

    assert mri_f.shape == (B, 1, 256)
    assert pet_f.shape == (B, 1, 256)
    assert cli_f.shape == (B, 1, 256)
    assert out.shape == (B, 1, 3 * 256)
    print("KERNEL_OK")
</pallas_src>

<mosaic_0001>
module attributes {stable_mosaic.version = 11 : i64} {
  func.func @_linear_kernel(%arg0: i32, %arg1: memref<4x512xf32, #tpu.memory_space<vmem>>, %arg2: memref<512x256xf32, #tpu.memory_space<vmem>>, %arg3: memref<1x256xf32, #tpu.memory_space<vmem>>, %arg4: memref<4x256xf32, #tpu.memory_space<vmem>>) attributes {dimension_semantics = [#tpu.dimension_semantics<arbitrary>], iteration_bounds = array<i64: 1>, scalar_prefetch = 0 : i64, scratch_operands = 0 : i64, tpu.core_type = #tpu.core_type<tc>, window_params = [{pipeline_mode = #tpu.pipeline_mode<synchronous>, transform_indices = @transform_0, window_bounds = array<i64: 4, 512>}, {pipeline_mode = #tpu.pipeline_mode<synchronous>, transform_indices = @transform_1, window_bounds = array<i64: 512, 256>}, {pipeline_mode = #tpu.pipeline_mode<synchronous>, transform_indices = @transform_2, window_bounds = array<i64: 1, 256>}, {pipeline_mode = #tpu.pipeline_mode<synchronous>, transform_indices = @transform_3, window_bounds = array<i64: 4, 256>}]} {
    %c0 = arith.constant 0 : index
    %c0_0 = arith.constant 0 : index
    %0 = vector.load %arg1[%c0, %c0_0] : memref<4x512xf32, #tpu.memory_space<vmem>>, vector<4x512xf32>
    %c0_1 = arith.constant 0 : index
    %c0_2 = arith.constant 0 : index
    %1 = vector.load %arg2[%c0_1, %c0_2] : memref<512x256xf32, #tpu.memory_space<vmem>>, vector<512x256xf32>
    %cst = arith.constant dense<0.000000e+00> : vector<4x256xf32>
    %2 = tpu.matmul %0, %1, %cst {dimension_numbers = #tpu.dot_dimension_numbers<[1], [0], [0], [1], [0, 0, 1, 1], [], []>} : vector<4x512xf32>, vector<512x256xf32>, vector<4x256xf32> -> vector<4x256xf32>
    %c0_3 = arith.constant 0 : index
    %c0_4 = arith.constant 0 : index
    %3 = vector.load %arg3[%c0_3, %c0_4] : memref<1x256xf32, #tpu.memory_space<vmem>>, vector<1x256xf32>
    %4 = vector.broadcast %3 : vector<1x256xf32> to vector<4x256xf32>
    %5 = arith.addf %2, %4 : vector<4x256xf32>
    %c0_5 = arith.constant 0 : index
    %c0_6 = arith.constant 0 : index
    %6 = vector.load %arg4[%c0_5, %c0_6] : memref<4x256xf32, #tpu.memory_space<vmem>>, vector<4x256xf32>
    tpu.vector_store %arg4[%c0_5, %c0_6], %5 {strides = array<i32>} : memref<4x256xf32, #tpu.memory_space<vmem>>, vector<4x256xf32>,
    return
  }
  func.func @transform_0(%arg0: i32) -> (i32, i32) {
    %c0_i32 = arith.constant 0 : i32
    %c0_i32_0 = arith.constant 0 : i32
    %c0_i32_1 = arith.constant 0 : i32
    return %c0_i32, %c0_i32_0 : i32, i32
  }
  func.func @transform_1(%arg0: i32) -> (i32, i32) {
    %c0_i32 = arith.constant 0 : i32
    %c0_i32_0 = arith.constant 0 : i32
    %c0_i32_1 = arith.constant 0 : i32
    return %c0_i32, %c0_i32_0 : i32, i32
  }
  func.func @transform_2(%arg0: i32) -> (i32, i32) {
    %c0_i32 = arith.constant 0 : i32
    %c0_i32_0 = arith.constant 0 : i32
    %c0_i32_1 = arith.constant 0 : i32
    return %c0_i32, %c0_i32_0 : i32, i32
  }
  func.func @transform_3(%arg0: i32) -> (i32, i32) {
    %c0_i32 = arith.constant 0 : i32
    %c0_i32_0 = arith.constant 0 : i32
    %c0_i32_1 = arith.constant 0 : i32
    return %c0_i32, %c0_i32_0 : i32, i32
  }
}

</mosaic_0001>

<llo_original>
// kernel: tpu_custom_call.1
$region0: #{tpu_custom_call.1}
  #allocation0 [shape = 'u32[]', space=smem, size = 0x4, offset = 0x4, fixed_abs, tag = 'smem constant byte address 0x4 - core index']
  #allocation1 [shape = 'u32[144,128]{1,0:T(1,128)}', space=vmem, size = 0x12000, scoped, tag = 'internal scratch']
  %s0 = inlined_call_operand.hbm [shape: f32[4,512], index: 0, kind: input, shape index: {}]
  %s1 = inlined_call_operand.hbm [shape: f32[512,256], index: 1, kind: input, shape index: {}]
  %s2 = inlined_call_operand.vmem [shape: f32[1,256], index: 2, kind: input, shape index: {}]
  %s3 = inlined_call_operand.hbm [shape: f32[4,256], index: 3, kind: output, shape index: {}]
  %s4 = sld [smem:[#allocation0]]
  $region30: #{tpu_custom_call.1} parent=0
    _
  %s6 = ssub.s32 1, %s4
  %s7 = scalar_select 0, %s6, %s4
  $region1: #{tpu_custom_call.1} parent=0
    #allocation2 [shape = 'u8[8192]{0}', space=vmem, size = 0x2000, scoped, tag = 'input window, operand 0, single buffered']
    #allocation3 [shape = 's32[1]{0}', space=sflag, size = 0x4, scoped, tag = 'scoped memory for tpu_custom_call.1']
    #allocation4 [shape = 's32[1]{0}', space=sflag, size = 0x4, scoped, tag = 'scoped memory for tpu_custom_call.1']
    #allocation5 [shape = 'u8[524288]{0}', space=vmem, size = 0x80000, scoped, tag = 'input window, operand 1, single buffered']
    #allocation6 [shape = 's32[1]{0}', space=sflag, size = 0x4, scoped, tag = 'scoped memory for tpu_custom_call.1']
    #allocation7 [shape = 'u8[4096]{0}', space=vmem, size = 0x1000, scoped, tag = 'output window, operand 0, single buffered']
    %8 = vsyncpa [#allocation3], 0
    %9 = vsyncpa [#allocation6], 0
    %10 = vsyncpa [#allocation4], 0
    // Predicated region
    $region2: #{tpu_custom_call.1} parent=1 // pred_check
      _
    $region3: #{tpu_custom_call.1} parent=1 // pred_check_branch
      %12 = sbr.rel (0) target = $region5
    $region4: #{tpu_custom_call.1} parent=1 // pred_region
      %s14 = ssub.s32 256, 256
      %15 = vsyncadd [#allocation3], %s14
      %s17 = sshll.u32 [#allocation2], 4
      %s18 = int_to_ptr.vmem [resolvable:$true] %s17
      %20 = dma.hbm_to_vmem [thread:$0]  %s0, 256, %s18, [#allocation3]
    $region5: #{tpu_custom_call.1} parent=1 // pred_fallthru
      _
    // Predicated region
    $region6: #{tpu_custom_call.1} parent=1 // pred_check
      _
    $region7: #{tpu_custom_call.1} parent=1 // pred_check_branch
      %22 = sbr.rel (0) target = $region9
    $region8: #{tpu_custom_call.1} parent=1 // pred_region
      %s24 = ssub.s32 16384, 16384
      %25 = vsyncadd [#allocation6], %s24
      %s26 = sshll.u32 [#allocation5], 4
      %s27 = int_to_ptr.vmem [resolvable:$true] %s26
      %32 = dma.hbm_to_vmem [thread:$0]  %s1, 16384, %s27, [#allocation6], 256, 256, 16
    $region9: #{tpu_custom_call.1} parent=1 // pred_fallthru
      _
    // Predicated region
    $region10: #{tpu_custom_call.1} parent=1 // pred_check
      _
    $region11: #{tpu_custom_call.1} parent=1 // pred_check_branch
      %34 = sbr.rel (0) target = $region13
    $region12: #{tpu_custom_call.1} parent=1 // pred_region
      _
    $region13: #{tpu_custom_call.1} parent=1 // pred_fallthru
      _
    // Predicated region
    $region14: #{tpu_custom_call.1} parent=1 // pred_check
      _
    $region15: #{tpu_custom_call.1} parent=1 // pred_check_branch
      %36 = sbr.rel (0) target = $region17
    $region16: #{tpu_custom_call.1} parent=1 // pred_region
      %37 = dma.done [#allocation3], 256
    $region17: #{tpu_custom_call.1} parent=1 // pred_fallthru
      _
    // Predicated region
    $region18: #{tpu_custom_call.1} parent=1 // pred_check
      _
    $region19: #{tpu_custom_call.1} parent=1 // pred_check_branch
      %39 = sbr.rel (0) target = $region21
    $region20: #{tpu_custom_call.1} parent=1 // pred_region
      %40 = dma.done [#allocation6], 16384
    $region21: #{tpu_custom_call.1} parent=1 // pred_fallthru
      _
    %v41 = vld [vmem:[#allocation2] sm:$0xff]
    %v42 = vld [vmem:[#allocation2 + $0x8] sm:$0xff]
    %v43 = vld [vmem:[#allocation5] sm:$0xff]
    %v44 = vld [vmem:[#allocation5 + $0x8] sm:$0xff]
    %v45 = vld [vmem:[#allocation5 + $0x10] sm:$0xff]
    %v46 = vld [vmem:[#allocation5 + $0x18] sm:$0xff]
    %v47 = vld [vmem:[#allocation5 + $0x20] sm:$0xff]
    %v48 = vld [vmem:[#allocation5 + $0x28] sm:$0xff]
    %v49 = vld [vmem:[#allocation5 + $0x30] sm:$0xff]
    %v50 = vld [vmem:[#allocation5 + $0x38] sm:$0xff]
    %v51 = vld [vmem:[#allocation5 + $0x40] sm:$0xff]
    %v52 = vld [vmem:[#allocation5 + $0x48] sm:$0xff]
    %v53 = vld [vmem:[#allocation5 + $0x50] sm:$0xff]
    %v54 = vld [vmem:[#allocation5 + $0x58] sm:$0xff]
    %v55 = vld [vmem:[#allocation5 + $0x60] sm:$0xff]
    %v56 = vld [vmem:[#allocation5 + $0x68] sm:$0xff]
    %v57 = vld [vmem:[#allocation5 + $0x70] sm:$0xff]
    %v58 = vld [vmem:[#allocation5 + $0x78] sm:$0xff]
    %v59 = vld [vmem:[#allocation5 + $0x80] sm:$0xff]
    %v60 = vld [vmem:[#allocation5 + $0x88] sm:$0xff]
    %v61 = vld [vmem:[#allocation5 + $0x90] sm:$0xff]
    %v62 = vld [vmem:[#allocation5 + $0x98] sm:$0xff]
    %v63 = vld [vmem:[#allocation5 + $0xa0] sm:$0xff]
    %v64 = vld [vmem:[#allocation5 + $0xa8] sm:$0xff]
    %v65 = vld [vmem:[#allocation5 + $0xb0] sm:$0xff]
    %v66 = vld [vmem:[#allocation5 + $0xb8] sm:$0xff]
    %v67 = vld [vmem:[#allocation5 + $0xc0] sm:$0xff]
    %v68 = vld [vmem:[#allocation5 + $0xc8] sm:$0xff]
    %v69 = vld [vmem:[#allocation5 + $0xd0] sm:$0xff]
    %v70 = vld [vmem:[#allocation5 + $0xd8] sm:$0xff]
    %v71 = vld [vmem:[#allocation5 + $0xe0] sm:$0xff]
    %v72 = vld [vmem:[#allocation5 + $0xe8] sm:$0xff]
    %v73 = vld [vmem:[#allocation5 + $0xf0] sm:$0xff]
    %v74 = vld [vmem:[#allocation5 + $0xf8] sm:$0xff]
    %v75 = vld [vmem:[#allocation5 + $0x100] sm:$0xff]
    %v76 = vld [vmem:[#allocation5 + $0x108] sm:$0xff]
    %v77 = vld [vmem:[#allocation5 + $0x110] sm:$0xff]
    %v78 = vld [vmem:[#allocation5 + $0x118] sm:$0xff]
    %v79 = vld [vmem:[#allocation5 + $0x120] sm:$0xff]
    %v80 = vld [vmem:[#allocation5 + $0x128] sm:$0xff]
    %v81 = vld [vmem:[#allocation5 + $0x130] sm:$0xff]
    %v82 = vld [vmem:[#allocation5 + $0x138] sm:$0xff]
    %v83 = vld [vmem:[#allocation5 + $0x140] sm:$0xff]
    %v84 = vld [vmem:[#allocation5 + $0x148] sm:$0xff]
    %v85 = vld [vmem:[#allocation5 + $0x150] sm:$0xff]
    %v86 = vld [vmem:[#allocation5 + $0x158] sm:$0xff]
    %v87 = vld [vmem:[#allocation5 + $0x160] sm:$0xff]
    %v88 = vld [vmem:[#allocation5 + $0x168] sm:$0xff]
    %v89 = vld [vmem:[#allocation5 + $0x170] sm:$0xff]
    %v90 = vld [vmem:[#allocation5 + $0x178] sm:$0xff]
    %v91 = vld [vmem:[#allocation5 + $0x180] sm:$0xff]
    %v92 = vld [vmem:[#allocation5 + $0x188] sm:$0xff]
    %v93 = vld [vmem:[#allocation5 + $0x190] sm:$0xff]
    %v94 = vld [vmem:[#allocation5 + $0x198] sm:$0xff]
    %v95 = vld [vmem:[#allocation5 + $0x1a0] sm:$0xff]
    %v96 = vld [vmem:[#allocation5 + $0x1a8] sm:$0xff]
    %v97 = vld [vmem:[#allocation5 + $0x1b0] sm:$0xff]
    %v98 = vld [vmem:[#allocation5 + $0x1b8] sm:$0xff]
    %v99 = vld [vmem:[#allocation5 + $0x1c0] sm:$0xff]
    %v100 = vld [vmem:[#allocation5 + $0x1c8] sm:$0xff]
    %v101 = vld [vmem:[#allocation5 + $0x1d0] sm:$0xff]
    %v102 = vld [vmem:[#allocation5 + $0x1d8] sm:$0xff]
    %v103 = vld [vmem:[#allocation5 + $0x1e0] sm:$0xff]
    %v104 = vld [vmem:[#allocation5 + $0x1e8] sm:$0xff]
    %v105 = vld [vmem:[#allocation5 + $0x1f0] sm:$0xff]
    %v106 = vld [vmem:[#allocation5 + $0x1f8] sm:$0xff]
    %v107 = vld [vmem:[#allocation5 + $0x200] sm:$0xff]
    %v108 = vld [vmem:[#allocation5 + $0x208] sm:$0xff]
    %v109 = vld [vmem:[#allocation5 + $0x210] sm:$0xff]
    %v110 = vld [vmem:[#allocation5 + $0x218] sm:$0xff]
    %v111 = vld [vmem:[#allocation5 + $0x220] sm:$0xff]
    %v112 = vld [vmem:[#allocation5 + $0x228] sm:$0xff]
    %v113 = vld [vmem:[#allocation5 + $0x230] sm:$0xff]
    %v114 = vld [vmem:[#allocation5 + $0x238] sm:$0xff]
    %v115 = vld [vmem:[#allocation5 + $0x240] sm:$0xff]
    %v116 = vld [vmem:[#allocation5 + $0x248] sm:$0xff]
    %v117 = vld [vmem:[#allocation5 + $0x250] sm:$0xff]
    %v118 = vld [vmem:[#allocation5 + $0x258] sm:$0xff]
    %v119 = vld [vmem:[#allocation5 + $0x260] sm:$0xff]
    %v120 = vld [vmem:[#allocation5 + $0x268] sm:$0xff]
    %v121 = vld [vmem:[#allocation5 + $0x270] sm:$0xff]
    %v122 = vld [vmem:[#allocation5 + $0x278] sm:$0xff]
    %v123 = vld [vmem:[#allocation5 + $0x280] sm:$0xff]
    %v124 = vld [vmem:[#allocation5 + $0x288] sm:$0xff]
    %v125 = vld [vmem:[#allocation5 + $0x290] sm:$0xff]
    %v126 = vld [vmem:[#allocation5 + $0x298] sm:$0xff]
    %v127 = vld [vmem:[#allocation5 + $0x2a0] sm:$0xff]
    %v128 = vld [vmem:[#allocation5 + $0x2a8] sm:$0xff]
    %v129 = vld [vmem:[#allocation5 + $0x2b0] sm:$0xff]
    %v130 = vld [vmem:[#allocation5 + $0x2b8] sm:$0xff]
    %v131 = vld [vmem:[#allocation5 + $0x2c0] sm:$0xff]
    %v132 = vld [vmem:[#allocation5 + $0x2c8] sm:$0xff]
    %v133 = vld [vmem:[#allocation5 + $0x2d0] sm:$0xff]
    %v134 = vld [vmem:[#allocation5 + $0x2d8] sm:$0xff]
    %v135 = vld [vmem:[#allocation5 + $0x2e0] sm:$0xff]
    %v136 = vld [vmem:[#allocation5 + $0x2e8] sm:$0xff]
    %v137 = vld [vmem:[#allocation5 + $0x2f0] sm:$0xff]
    %v138 = vld [vmem:[#allocation5 + $0x2f8] sm:$0xff]
    %v139 = vld [vmem:[#allocation5 + $0x300] sm:$0xff]
    %v140 = vld [vmem:[#allocation5 + $0x308] sm:$0xff]
    %v141 = vld [vmem:[#allocation5 + $0x310] sm:$0xff]
    %v142 = vld [vmem:[#allocation5 + $0x318] sm:$0xff]
    %v143 = vld [vmem:[#allocation5 + $0x320] sm:$0xff]
    %v144 = vld [vmem:[#allocation5 + $0x328] sm:$0xff]
    %v145 = vld [vmem:[#allocation5 + $0x330] sm:$0xff]
    %v146 = vld [vmem:[#allocation5 + $0x338] sm:$0xff]
    %v147 = vld [vmem:[#allocation5 + $0x340] sm:$0xff]
    %v148 = vld [vmem:[#allocation5 + $0x348] sm:$0xff]
    %v149 = vld [vmem:[#allocation5 + $0x350] sm:$0xff]
    %v150 = vld [vmem:[#allocation5 + $0x358] sm:$0xff]
    %v151 = vld [vmem:[#allocation5 + $0x360] sm:$0xff]
    %v152 = vld [vmem:[#allocation5 + $0x368] sm:$0xff]
    %v153 = vld [vmem:[#allocation5 + $0x370] sm:$0xff]
    %v154 = vld [vmem:[#allocation5 + $0x378] sm:$0xff]
    %v155 = vld [vmem:[#allocation5 + $0x380] sm:$0xff]
    %v156 = vld [vmem:[#allocation5 + $0x388] sm:$0xff]
    %v157 = vld [vmem:[#allocation5 + $0x390] sm:$0xff]
    %v158 = vld [vmem:[#allocation5 + $0x398] sm:$0xff]
    %v159 = vld [vmem:[#allocation5 + $0x3a0] sm:$0xff]
    %v160 = vld [vmem:[#allocation5 + $0x3a8] sm:$0xff]
    %v161 = vld [vmem:[#allocation5 + $0x3b0] sm:$0xff]
    %v162 = vld [vmem:[#allocation5 + $0x3b8] sm:$0xff]
    %v163 = vld [vmem:[#allocation5 + $0x3c0] sm:$0xff]
    %v164 = vld [vmem:[#allocation5 + $0x3c8] sm:$0xff]
    %v165 = vld [vmem:[#allocation5 + $0x3d0] sm:$0xff]
    %v166 = vld [vmem:[#allocation5 + $0x3d8] sm:$0xff]
    %v167 = vld [vmem:[#allocation5 + $0x3e0] sm:$0xff]
    %v168 = vld [vmem:[#allocation5 + $0x3e8] sm:$0xff]
    %v169 = vld [vmem:[#allocation5 + $0x3f0] sm:$0xff]
    %v170 = vld [vmem:[#allocation5 + $0x3f8] sm:$0xff]
    %v171 = vld [vmem:[%s2] sm:$0x3]
    %v173 = vlaneseq
    %v174 = vshrl.u32 %v173, 7
    %v175 = vsub.s32 0, %v174
    %v176 = vrot.slane %v171, %v175
    %v177 = vlaneseq
    %v178 = vshrl.u32 %v177, 7
    %v179 = vsub.s32 1, %v178
    %v180 = vrot.slane %v171, %v179
    %v185 = vcombine.high %v41, %v41
    %v186 = vcombine.high %v42, %v42
    %189 = vmatprep.subr.mxu0 %v74
    %190 = vmatpush1.msra.mxu0 %v73
    %191 = vmatprep.subr.mxu0 %v72
    %192 = vmatpush1.msra.mxu0 %v71
    %193 = vmatprep.subr.mxu0 %v70
    %194 = vmatpush1.msra.mxu0 %v69
    %195 = vmatprep.subr.mxu0 %v68
    %196 = vmatpush1.msra.mxu0 %v67
    %197 = vmatprep.subr.mxu0 %v66
    %198 = vmatpush1.msra.mxu0 %v65
    %199 = vmatprep.subr.mxu0 %v64
    %200 = vmatpush1.msra.mxu0 %v63
    %201 = vmatprep.subr.mxu0 %v62
    %202 = vmatpush1.msra.mxu0 %v61
    %203 = vmatprep.subr.mxu0 %v60
    %204 = vmatpush1.msra.mxu0 %v59
    %205 = vmatprep.subr.mxu0 %v58
    %206 = vmatpush1.msra.mxu0 %v57
    %207 = vmatprep.subr.mxu0 %v56
    %208 = vmatpush1.msra.mxu0 %v55
    %209 = vmatprep.subr.mxu0 %v54
    %210 = vmatpush1.msra.mxu0 %v53
    %211 = vmatprep.subr.mxu0 %v52
    %212 = vmatpush1.msra.mxu0 %v51
    %213 = vmatprep.subr.mxu0 %v50
    %214 = vmatpush1.msra.mxu0 %v49
    %215 = vmatprep.subr.mxu0 %v48
    %216 = vmatpush1.msra.mxu0 %v47
    %217 = vmatprep.subr.mxu0 %v46
    %218 = vmatpush1.msra.mxu0 %v45
    %219 = vmatprep.subr.mxu0 %v44
    %220 = vmatpush1.msra.mxu0 %v43
    %221 = vmatprep.subr.mxu0 %v106
    %222 = vmatpush2.msra.mxu0 %v105
    %223 = vmatprep.subr.mxu0 %v104
    %224 = vmatpush2.msra.mxu0 %v103
    %225 = vmatprep.subr.mxu0 %v102
    %226 = vmatpush2.msra.mxu0 %v101
    %227 = vmatprep.subr.mxu0 %v100
    %228 = vmatpush2.msra.mxu0 %v99
    %229 = vmatprep.subr.mxu0 %v98
    %230 = vmatpush2.msra.mxu0 %v97
    %231 = vmatprep.subr.mxu0 %v96
    %232 = vmatpush2.msra.mxu0 %v95
    %233 = vmatprep.subr.mxu0 %v94
    %234 = vmatpush2.msra.mxu0 %v93
    %235 = vmatprep.subr.mxu0 %v92
    %236 = vmatpush2.msra.mxu0 %v91
    %237 = vmatprep.subr.mxu0 %v90
    %238 = vmatpush2.msra.mxu0 %v89
    %239 = vmatprep.subr.mxu0 %v88
    %240 = vmatpush2.msra.mxu0 %v87
    %241 = vmatprep.subr.mxu0 %v86
    %242 = vmatpush2.msra.mxu0 %v85
    %243 = vmatprep.subr.mxu0 %v84
    %244 = vmatpush2.msra.mxu0 %v83
    %245 = vmatprep.subr.mxu0 %v82
    %246 = vmatpush2.msra.mxu0 %v81
    %247 = vmatprep.subr.mxu0 %v80
    %248 = vmatpush2.msra.mxu0 %v79
    %249 = vmatprep.subr.mxu0 %v78
    %250 = vmatpush2.msra.mxu0 %v77
    %251 = vmatprep.subr.mxu0 %v76
    %252 = vmatpush2.msra.mxu0 %v75
    %253 = vmatprep.mubr.f32.mxu0 %v185
    %254 = vmatmul.mubr.f32.gmra.mxu0 %v41
    %v255 = vpop.f32.mrf.mxu0
    %v256 = vadd.f32 %v176, %v255
    %v257 = vpop.f32.mrf.mxu0
    %v258 = vadd.f32 %v180, %v257
    %259 = vdwg.mxu0
    %260 = vmatprep.subr.mxu0 %v138
    %261 = vmatpush1.msra.mxu0 %v137
    %262 = vmatprep.subr.mxu0 %v136
    %263 = vmatpush1.msra.mxu0 %v135
    %264 = vmatprep.subr.mxu0 %v134
    %265 = vmatpush1.msra.mxu0 %v133
    %266 = vmatprep.subr.mxu0 %v132
    %267 = vmatpush1.msra.mxu0 %v131
    %268 = vmatprep.subr.mxu0 %v130
    %269 = vmatpush1.msra.mxu0 %v129
    %270 = vmatprep.subr.mxu0 %v128
    %271 = vmatpush1.msra.mxu0 %v127
    %272 = vmatprep.subr.mxu0 %v126
    %273 = vmatpush1.msra.mxu0 %v125
    %274 = vmatprep.subr.mxu0 %v124
    %275 = vmatpush1.msra.mxu0 %v123
    %276 = vmatprep.subr.mxu0 %v122
    %277 = vmatpush1.msra.mxu0 %v121
    %278 = vmatprep.subr.mxu0 %v120
    %279 = vmatpush1.msra.mxu0 %v119
    %280 = vmatprep.subr.mxu0 %v118
    %281 = vmatpush1.msra.mxu0 %v117
    %282 = vmatprep.subr.mxu0 %v116
    %283 = vmatpush1.msra.mxu0 %v115
    %284 = vmatprep.subr.mxu0 %v114
    %285 = vmatpush1.msra.mxu0 %v113
    %286 = vmatprep.subr.mxu0 %v112
    %287 = vmatpush1.msra.mxu0 %v111
    %288 = vmatprep.subr.mxu0 %v110
    %289 = vmatpush1.msra.mxu0 %v109
    %290 = vmatprep.subr.mxu0 %v108
    %291 = vmatpush1.msra.mxu0 %v107
    %292 = vmatprep.subr.mxu0 %v170
    %293 = vmatpush2.msra.mxu0 %v169
    %294 = vmatprep.subr.mxu0 %v168
    %295 = vmatpush2.msra.mxu0 %v167
    %296 = vmatprep.subr.mxu0 %v166
    %297 = vmatpush2.msra.mxu0 %v165
    %298 = vmatprep.subr.mxu0 %v164
    %299 = vmatpush2.msra.mxu0 %v163
    %300 = vmatprep.subr.mxu0 %v162
    %301 = vmatpush2.msra.mxu0 %v161
    %302 = vmatprep.subr.mxu0 %v160
    %303 = vmatpush2.msra.mxu0 %v159
    %304 = vmatprep.subr.mxu0 %v158
    %305 = vmatpush2.msra.mxu0 %v157
    %306 = vmatprep.subr.mxu0 %v156
    %307 = vmatpush2.msra.mxu0 %v155
    %308 = vmatprep.subr.mxu0 %v154
    %309 = vmatpush2.msra.mxu0 %v153
    %310 = vmatprep.subr.mxu0 %v152
    %311 = vmatpush2.msra.mxu0 %v151
    %312 = vmatprep.subr.mxu0 %v150
    %313 = vmatpush2.msra.mxu0 %v149
    %314 = vmatprep.subr.mxu0 %v148
    %315 = vmatpush2.msra.mxu0 %v147
    %316 = vmatprep.subr.mxu0 %v146
    %317 = vmatpush2.msra.mxu0 %v145
    %318 = vmatprep.subr.mxu0 %v144
    %319 = vmatpush2.msra.mxu0 %v143
    %320 = vmatprep.subr.mxu0 %v142
    %321 = vmatpush2.msra.mxu0 %v141
    %322 = vmatprep.subr.mxu0 %v140
    %323 = vmatpush2.msra.mxu0 %v139
    %324 = vmatprep.mubr.f32.mxu0 %v186
    %325 = vmatmul.mubr.f32.gmra.mxu0 %v42
    %v326 = vpop.f32.mrf.mxu0
    %v327 = vadd.f32 %v256, %v326
    %v328 = vpop.f32.mrf.mxu0
    %v329 = vadd.f32 %v258, %v328
    %330 = vdwg.mxu0
    %v333 = vcombine.low %v327, %v329
    %335 = vst [vmem:[#allocation7] sm:$0xff] %v333
    // Predicated region
    $region22: #{tpu_custom_call.1} parent=1 // pred_check
      _
    $region23: #{tpu_custom_call.1} parent=1 // pred_check_branch
      %337 = sbr.rel (0) target = $region25
    $region24: #{tpu_custom_call.1} parent=1 // pred_region
      %s339 = ssub.s32 128, 128
      %340 = vsyncadd [#allocation4], %s339
      %s342 = sshll.u32 [#allocation7], 4
      %s343 = int_to_ptr.vmem [resolvable:$true] %s342
      %345 = dma.vmem_to_hbm [thread:$0]  %s343, 128, %s3, [#allocation4]
    $region25: #{tpu_custom_call.1} parent=1 // pred_fallthru
      _
    // Predicated region
    $region26: #{tpu_custom_call.1} parent=1 // pred_check
      _
    $region27: #{tpu_custom_call.1} parent=1 // pred_check_branch
      %347 = sbr.rel (0) target = $region29
    $region28: #{tpu_custom_call.1} parent=1 // pred_region
      %348 = dma.done [#allocation4], 128
    $region29: #{tpu_custom_call.1} parent=1 // pred_fallthru
      _
    %349 = vsyncpa [#allocation3], 1
    %350 = vsyncpa [#allocation6], 1
    %351 = vsyncpa [#allocation4], 1

</llo_original>
